<compile_context>
chip_gen: v5e
topology: v5e:2x2
jax: 0.10.0
libtpu: 0.0.40
codegen_flags: <defaults>
</compile_context>

<pallas_src>
import jax
import jax.numpy as jnp
from jax.experimental import pallas as pl
from jax.experimental.pallas import tpu as pltpu

LOSS_VALUE = 0.5  # matches MockLossComponent(value=0.5)


def _mock_loss_kernel(value_ref, out_ref):
    # Copy the runtime scalar loss value into the scalar output (both f32 SMEM).
    out_ref[0, 0] = value_ref[0, 0]


def mock_loss_component(pred: jax.Array, target: jax.Array,
                        value: float = LOSS_VALUE) -> jax.Array:
    """Returns a 0-d array of `value` with pred's dtype (inputs are ignored)."""
    del target  # the torch module ignores both inputs; only pred.dtype is used.
    value_arr = jnp.full((1, 1), value, dtype=jnp.float32)
    out = pl.pallas_call(
        _mock_loss_kernel,
        out_shape=jax.ShapeDtypeStruct((1, 1), jnp.float32),
        in_specs=[pl.BlockSpec(memory_space=pltpu.SMEM)],   # runtime `value`
        out_specs=pl.BlockSpec(memory_space=pltpu.SMEM),
        cost_estimate=pl.CostEstimate(flops=0, transcendentals=0,
                                      bytes_accessed=0),
    )(value_arr)
    # 0-d scalar in pred's dtype, same as torch.tensor(value, dtype=pred.dtype).
    # TODO(synk): requires_grad semantics (leaf-with-grad constant) have no
    # Pallas/JAX equivalent here; gradient plumbing is left to the caller.
    return out.reshape(()).astype(pred.dtype)


if __name__ == "__main__":
    key = jax.random.PRNGKey(0)
    k1, k2 = jax.random.split(key)
    # Small shapes consistent with a generic (pred, target) loss signature.
    pred = jax.random.normal(k1, (2, 4, 16, 16), dtype=jnp.float32)
    target = jax.random.normal(k2, (2, 4, 16, 16), dtype=jnp.float32)

    loss = mock_loss_component(pred, target)
    jax.block_until_ready(loss)
    assert loss.shape == ()
    assert loss.dtype == pred.dtype
    assert abs(float(loss) - LOSS_VALUE) < 1e-6

    # A different `value` must flow through at runtime (no recompile, not 0.5).
    loss2 = mock_loss_component(pred, target, value=1.25)
    jax.block_until_ready(loss2)
    assert abs(float(loss2) - 1.25) < 1e-6

    print("KERNEL_OK")
</pallas_src>

<mosaic_0001>
module attributes {stable_mosaic.version = 11 : i64} {
  func.func @_mock_loss_kernel(%arg0: memref<1x1xf32, #tpu.memory_space<smem>>, %arg1: memref<1x1xf32, #tpu.memory_space<smem>>) attributes {dimension_semantics = [], scalar_prefetch = 0 : i64, scratch_operands = 0 : i64, tpu.core_type = #tpu.core_type<tc>} {
    %c0 = arith.constant 0 : index
    %c0_0 = arith.constant 0 : index
    %0 = memref.load %arg0[%c0, %c0_0] : memref<1x1xf32, #tpu.memory_space<smem>>
    %c0_1 = arith.constant 0 : index
    %c0_2 = arith.constant 0 : index
    %1 = memref.load %arg1[%c0_1, %c0_2] : memref<1x1xf32, #tpu.memory_space<smem>>
    memref.store %0, %arg1[%c0_1, %c0_2] : memref<1x1xf32, #tpu.memory_space<smem>>
    return
  }
}

</mosaic_0001>

<llo_original>
// kernel: tpu_custom_call.1
$region0: #{tpu_custom_call.1}
  #allocation0 [shape = 'u32[]', space=smem, size = 0x4, offset = 0x4, fixed_abs, tag = 'smem constant byte address 0x4 - core index']
  #allocation1 [shape = 'u32[72,128]{1,0:T(1,128)}', space=vmem, size = 0x9000, scoped, tag = 'internal scratch']
  #allocation2 [shape = 'f32[1,1]{1,0:T(1,128)S(6)}', space=smem, size = 0x200, scoped, tag = 'scoped memory for tpu_custom_call.1']
  %s0 = inlined_call_operand.<no memory space> [shape: f32[1,1], index: 0, kind: input, shape index: {}]
  %s1 = inlined_call_operand.hbm [shape: f32[1,1], index: 1, kind: output, shape index: {}]
  %s2 = sld [smem:[#allocation0]]
  $region14: #{tpu_custom_call.1} parent=0
    _
  %s4 = ssub.s32 1, %s2
  %s5 = scalar_select 0, %s4, %s2
  %6 = sst [smem:[#allocation2]] %s0
  $region1: #{tpu_custom_call.1} parent=0
    #allocation3 [shape = 'u8[512]{0}', space=smem, size = 0x200, scoped, tag = 'output window, operand 0, single buffered']
    #allocation4 [shape = 's32[1]{0}', space=sflag, size = 0x4, scoped, tag = 'scoped memory for tpu_custom_call.1']
    %7 = vsyncpa [#allocation4], 0
    // Predicated region
    $region2: #{tpu_custom_call.1} parent=1 // pred_check
      _
    $region3: #{tpu_custom_call.1} parent=1 // pred_check_branch
      %9 = sbr.rel (0) target = $region5
    $region4: #{tpu_custom_call.1} parent=1 // pred_region
      _
    $region5: #{tpu_custom_call.1} parent=1 // pred_fallthru
      _
    %s10 = sld [smem:[#allocation2]]
    %s11 = scalar_lea.smem [#allocation3], 0
    %12 = sst [smem:[%s11]] %s10
    // Predicated region
    $region6: #{tpu_custom_call.1} parent=1 // pred_check
      _
    $region7: #{tpu_custom_call.1} parent=1 // pred_check_branch
      %14 = sbr.rel (0) target = $region9
    $region8: #{tpu_custom_call.1} parent=1 // pred_region
      %16 = vsyncadd [#allocation4], 0
      %s18 = sshll.u32 %s1, 4
      %s19 = int_to_ptr.hbm [resolvable:$true] %s18
      %21 = dma.smem_to_hbm [#allocation3], 16, %s19, [#allocation4]
    $region9: #{tpu_custom_call.1} parent=1 // pred_fallthru
      _
    // Predicated region
    $region10: #{tpu_custom_call.1} parent=1 // pred_check
      _
    $region11: #{tpu_custom_call.1} parent=1 // pred_check_branch
      %23 = sbr.rel (0) target = $region13
    $region12: #{tpu_custom_call.1} parent=1 // pred_region
      %25 = dma.done [#allocation4], 16
    $region13: #{tpu_custom_call.1} parent=1 // pred_fallthru
      _
    %26 = sfence
    %27 = vsyncpa [#allocation4], 1

</llo_original>
